<compile_context>
chip_gen: v5e
topology: v5e:2x2
jax: 0.10.0
libtpu: 0.0.40
codegen_flags: <defaults>
</compile_context>

<pallas_src>
import functools

import jax
import jax.numpy as jnp
import numpy as np
from jax.experimental import pallas as pl
from jax.experimental.pallas import tpu as pltpu


def _round_up(x, m):
    return (x + m - 1) // m * m


# ---------------------------------------------------------------------------
# Kernel
# ---------------------------------------------------------------------------
def ggnn_update_kernel(msg_ref, h_ref, types_ref, w_ref, b0_ref, b1_ref,
                       out_ref, *, hidden, compute_dtype):
    H = hidden
    x = msg_ref[...]                              # [tile, H]
    h = h_ref[...]                                # [tile, H]
    t = types_ref[...]                            # [tile, 1] int32

    # One fused MXU matmul: [tile, 2H] @ [2H, 8H] (f32 accumulation).
    # Column layout of W: [ cell0: r | z | n_x | n_h   |   cell1: r | z | n_x | n_h ]
    xh = jnp.concatenate([x, h], axis=1).astype(compute_dtype)
    w = w_ref[...].astype(compute_dtype)
    g = jnp.dot(xh, w, preferred_element_type=jnp.float32)     # [tile, 8H]

    m0 = (t == 0).astype(jnp.float32)             # [tile, 1]
    m1 = (t == 1).astype(jnp.float32)

    # Blend the two cells' gate PRE-activations per row, then do a single GRU:
    # halves EUP transcendental width and post-matmul VALU/VMEM vs computing both.
    pre = m0 * (g[:, :4 * H] + b0_ref[...]) + m1 * (g[:, 4 * H:] + b1_ref[...])
    rz = jax.nn.sigmoid(pre[:, :2 * H])           # [tile, 2H]
    r = rz[:, :H]
    z = rz[:, H:]
    n = jnp.tanh(pre[:, 2 * H:3 * H] + r * pre[:, 3 * H:])     # [tile, H]

    hf = h.astype(jnp.float32)
    out = ((1.0 - z) * n + z * hf) * (m0 + m1)    # (m0+m1) zeroes node_type >= 2
    out_ref[...] = out.astype(out_ref.dtype)


# ---------------------------------------------------------------------------
# Wrapper
# ---------------------------------------------------------------------------
def _invariant_spec(shape):
    """Grid-invariant BlockSpec (block index constant -> fetched once, no re-DMA)."""
    zero = (0,) * len(shape)
    return pl.BlockSpec(shape, lambda i, _z=zero: _z)


def ggnn_update(messages, node_states, node_types, fused_params, *,
                tile_n=512, compute_dtype=jnp.float32):
    """messages, node_states: [N, H] (f32 or bf16); node_types: [N] int.

    fused_params = (W [2H, 8H], b0 [1, 4H], b1 [1, 4H]) from fuse_params().
    compute_dtype: matmul operand dtype (jnp.bfloat16 is a good choice on v6e/v7x
    for large H; accumulation stays f32 either way).
    """
    N, H = messages.shape
    w, b0, b1 = fused_params

    # Node tile: big (amortizes ~0.35us/step pipeline overhead), multiple of 16 so
    # both f32 and bf16 sublane tilings are legal; no padding, ragged edge is masked.
    tile = _round_up(min(tile_n, _round_up(N, 16)), 16)
    grid = (pl.cdiv(N, tile),)

    types2d = node_types.reshape(N, 1).astype(jnp.int32)

    node_spec = pl.BlockSpec((tile, H), lambda i: (i, 0))
    type_spec = pl.BlockSpec((tile, 1), lambda i: (i, 0))
    in_specs = [node_spec, node_spec, type_spec,
                _invariant_spec(w.shape),
                _invariant_spec(b0.shape),
                _invariant_spec(b1.shape)]

    # Rough VMEM need (double-buffered streamed tiles + resident weights + in-kernel
    # f32 intermediates).  Only raise the limit when the smallest per-chip default
    # (16 MiB on v5e) might be short, and never set it below the estimate: use a
    # flat 48 MiB, which fits every chip (v7x physical VMEM is 64 MiB per core).
    io_item = jnp.dtype(messages.dtype).itemsize
    w_bytes = int(w.size) * jnp.dtype(w.dtype).itemsize
    b_bytes = int(b0.size + b1.size) * jnp.dtype(b0.dtype).itemsize
    vmem_est = (2 * 3 * tile * H * io_item      # msg/state/out tiles, double-buffered
                + 2 * tile * 128 * 4            # lane-padded int32 type tiles
                + 2 * (w_bytes + b_bytes)       # weights/biases (worst case 2 bufs)
                + tile * 19 * H * 4             # xh, g, pre, rz, n, out intermediates
                + (2 << 20))                    # slack
    vmem_limit = None if vmem_est <= (16 << 20) else (48 << 20)

    kernel = functools.partial(ggnn_update_kernel, hidden=H,
                               compute_dtype=compute_dtype)

    out = pl.pallas_call(
        kernel,
        out_shape=jax.ShapeDtypeStruct((N, H), node_states.dtype),
        grid_spec=pltpu.PrefetchScalarGridSpec(
            num_scalar_prefetch=0,
            grid=grid,
            in_specs=in_specs,
            out_specs=node_spec,
        ),
        compiler_params=pltpu.CompilerParams(
            dimension_semantics=("parallel",),   # node tiles are independent
            vmem_limit_bytes=vmem_limit,
        ),
    )(messages, node_states, types2d, w, b0, b1)
    return out


# ---------------------------------------------------------------------------
# Parameters: PyTorch-style init + fused re-packing for the kernel
# ---------------------------------------------------------------------------
def init_params(key, H):
    """PyTorch nn.GRUCell-style params for the two cells (stmt, id).

    weight_ih/_hh: [3H, H] with gate-row order (r, z, n); bias_ih/_hh: [3H].
    Uniform(-1/sqrt(H), 1/sqrt(H)).
    """
    k = 1.0 / np.sqrt(H)
    keys = jax.random.split(key, 8)
    u = lambda kk, shape: jax.random.uniform(kk, shape, jnp.float32, minval=-k, maxval=k)
    w_ih0 = u(keys[0], (3 * H, H)); w_hh0 = u(keys[1], (3 * H, H))
    b_ih0 = u(keys[2], (3 * H,));   b_hh0 = u(keys[3], (3 * H,))
    w_ih1 = u(keys[4], (3 * H, H)); w_hh1 = u(keys[5], (3 * H, H))
    b_ih1 = u(keys[6], (3 * H,));   b_hh1 = u(keys[7], (3 * H,))
    return (w_ih0, w_hh0, b_ih0, b_hh0, w_ih1, w_hh1, b_ih1, b_hh1)


def fuse_params(torch_params, weight_dtype=jnp.float32):
    """Repack both GRUCells into one [2H, 8H] RHS for the fused [x|h] matmul.

    Returns:
      W  [2H, 8H]: rows 0..H-1 multiply x, rows H..2H-1 multiply h.
                   Columns per cell: [r | z | n_x | n_h]; cell0 then cell1.
                   r/z columns carry both the ih and hh weights (sum comes out of
                   the matmul already combined); n_x / n_h are block-diagonal.
      b0 [1, 4H]: cell0 biases [b_ir+b_hr | b_iz+b_hz | b_in | b_hn]
      b1 [1, 4H]: cell1 biases, same layout.
    """
    (w_ih0, w_hh0, b_ih0, b_hh0, w_ih1, w_hh1, b_ih1, b_hh1) = torch_params
    H = w_ih0.shape[1]
    zeros = jnp.zeros((H, H), jnp.float32)

    def wg(w, g):   # transposed gate block -> [H_in, H_out]
        return w[g * H:(g + 1) * H, :].T

    def bg(b, g):
        return b[g * H:(g + 1) * H][None, :]

    def cell_block(w_ih, w_hh):
        top = jnp.concatenate([wg(w_ih, 0), wg(w_ih, 1), wg(w_ih, 2), zeros], axis=1)
        bot = jnp.concatenate([wg(w_hh, 0), wg(w_hh, 1), zeros, wg(w_hh, 2)], axis=1)
        return jnp.concatenate([top, bot], axis=0)          # [2H, 4H]

    def cell_bias(b_ih, b_hh):
        return jnp.concatenate([bg(b_ih, 0) + bg(b_hh, 0),
                                bg(b_ih, 1) + bg(b_hh, 1),
                                bg(b_ih, 2), bg(b_hh, 2)], axis=1)   # [1, 4H]

    W = jnp.concatenate([cell_block(w_ih0, w_hh0),
                         cell_block(w_ih1, w_hh1)], axis=1)  # [2H, 8H]
    b0 = cell_bias(b_ih0, b_hh0)
    b1 = cell_bias(b_ih1, b_hh1)
    return W.astype(weight_dtype), b0, b1


# ---------------------------------------------------------------------------
# Pure-JAX reference (mirrors the PyTorch forward exactly)
# ---------------------------------------------------------------------------
def _gru_cell_ref(x, h, w_ih, w_hh, b_ih, b_hh):
    H = h.shape[-1]
    gi = x @ w_ih.T + b_ih
    gh = h @ w_hh.T + b_hh
    i_r, i_z, i_n = gi[:, :H], gi[:, H:2 * H], gi[:, 2 * H:]
    h_r, h_z, h_n = gh[:, :H], gh[:, H:2 * H], gh[:, 2 * H:]
    r = jax.nn.sigmoid(i_r + h_r)
    z = jax.nn.sigmoid(i_z + h_z)
    n = jnp.tanh(i_n + r * h_n)
    return (1.0 - z) * n + z * h


def ggnn_update_ref(messages, node_states, node_types, torch_params):
    (w_ih0, w_hh0, b_ih0, b_hh0, w_ih1, w_hh1, b_ih1, b_hh1) = torch_params
    out0 = _gru_cell_ref(messages, node_states, w_ih0, w_hh0, b_ih0, b_hh0)
    out1 = _gru_cell_ref(messages, node_states, w_ih1, w_hh1, b_ih1, b_hh1)
    t = node_types.reshape(-1, 1)
    return jnp.where(t == 0, out0,
                     jnp.where(t == 1, out1, jnp.zeros_like(out0)))


# ---------------------------------------------------------------------------
if __name__ == "__main__":
    key = jax.random.PRNGKey(0)

    def run_case(N, H, k, io_dtype=jnp.float32, rtol=1e-3, atol=1e-3):
        k_msg, k_state, k_types, k_params = jax.random.split(k, 4)
        messages = jax.random.normal(k_msg, (N, H), jnp.float32)
        node_states = jax.random.normal(k_state, (N, H), jnp.float32)
        node_types = jax.random.randint(k_types, (N,), 0, 3, jnp.int32)  # {0,1,2}

        torch_params = init_params(k_params, H)
        fused = fuse_params(torch_params)

        msg_io = messages.astype(io_dtype)
        st_io = node_states.astype(io_dtype)
        out = jax.block_until_ready(ggnn_update(msg_io, st_io, node_types, fused))
        ref = ggnn_update_ref(msg_io.astype(jnp.float32), st_io.astype(jnp.float32),
                              node_types, torch_params)
        np.testing.assert_allclose(np.asarray(out, dtype=np.float32),
                                   np.asarray(ref), rtol=rtol, atol=atol)

    k1, k2, k3 = jax.random.split(key, 3)
    run_case(16, 32, k1)                                   # tiny, single block
    run_case(300, 64, k2)                                  # ragged N -> masked edge block
    run_case(200, 128, k3, io_dtype=jnp.bfloat16,          # bf16 HBM I/O path
             rtol=5e-2, atol=5e-2)
    print("KERNEL_OK")
</pallas_src>

<mosaic_0001>
module attributes {stable_mosaic.version = 11 : i64} {
  func.func @ggnn_update_kernel(%arg0: i32, %arg1: memref<16x32xf32, #tpu.memory_space<vmem>>, %arg2: memref<16x32xf32, #tpu.memory_space<vmem>>, %arg3: memref<16x1xi32, #tpu.memory_space<vmem>>, %arg4: memref<64x256xf32, #tpu.memory_space<vmem>>, %arg5: memref<1x128xf32, #tpu.memory_space<vmem>>, %arg6: memref<1x128xf32, #tpu.memory_space<vmem>>, %arg7: memref<16x32xf32, #tpu.memory_space<vmem>>) attributes {dimension_semantics = [#tpu.dimension_semantics<parallel>], iteration_bounds = array<i64: 1>, scalar_prefetch = 0 : i64, scratch_operands = 0 : i64, tpu.core_type = #tpu.core_type<tc>, window_params = [{transform_indices = @transform_0, window_bounds = array<i64: 16, 32>}, {transform_indices = @transform_1, window_bounds = array<i64: 16, 32>}, {transform_indices = @transform_2, window_bounds = array<i64: 16, 1>}, {pipeline_mode = #tpu.pipeline_mode<synchronous>, transform_indices = @transform_3, window_bounds = array<i64: 64, 256>}, {pipeline_mode = #tpu.pipeline_mode<synchronous>, transform_indices = @transform_4, window_bounds = array<i64: 1, 128>}, {pipeline_mode = #tpu.pipeline_mode<synchronous>, transform_indices = @transform_5, window_bounds = array<i64: 1, 128>}, {transform_indices = @transform_6, window_bounds = array<i64: 16, 32>}]} {
    %c0 = arith.constant 0 : index
    %c0_0 = arith.constant 0 : index
    %0 = vector.load %arg1[%c0, %c0_0] : memref<16x32xf32, #tpu.memory_space<vmem>>, vector<16x32xf32>
    %c0_1 = arith.constant 0 : index
    %c0_2 = arith.constant 0 : index
    %1 = vector.load %arg2[%c0_1, %c0_2] : memref<16x32xf32, #tpu.memory_space<vmem>>, vector<16x32xf32>
    %c0_3 = arith.constant 0 : index
    %c0_4 = arith.constant 0 : index
    %2 = vector.load %arg3[%c0_3, %c0_4] : memref<16x1xi32, #tpu.memory_space<vmem>>, vector<16x1xi32>
    %3 = tpu.concatenate %0, %1 in 1 : vector<16x32xf32>, vector<16x32xf32> -> vector<16x64xf32>
    %c0_5 = arith.constant 0 : index
    %c0_6 = arith.constant 0 : index
    %4 = vector.load %arg4[%c0_5, %c0_6] : memref<64x256xf32, #tpu.memory_space<vmem>>, vector<64x256xf32>
    %cst = arith.constant dense<0.000000e+00> : vector<16x256xf32>
    %5 = tpu.matmul %3, %4, %cst {dimension_numbers = #tpu.dot_dimension_numbers<[1], [0], [0], [1], [0, 0, 1, 1], [], []>} : vector<16x64xf32>, vector<64x256xf32>, vector<16x256xf32> -> vector<16x256xf32>
    %c0_i32 = arith.constant 0 : i32
    %6 = vector.broadcast %c0_i32 : i32 to vector<16x1xi32>
    %7 = arith.cmpi eq, %2, %6 : vector<16x1xi32>
    %8 = arith.extui %7 : vector<16x1xi1> to vector<16x1xi32>
    %9 = arith.sitofp %8 : vector<16x1xi32> to vector<16x1xf32>
    %c1_i32 = arith.constant 1 : i32
    %10 = vector.broadcast %c1_i32 : i32 to vector<16x1xi32>
    %11 = arith.cmpi eq, %2, %10 : vector<16x1xi32>
    %12 = arith.extui %11 : vector<16x1xi1> to vector<16x1xi32>
    %13 = arith.sitofp %12 : vector<16x1xi32> to vector<16x1xf32>
    %14 = vector.extract_strided_slice %5 {offsets = [0, 0], sizes = [16, 128], strides = [1, 1]} : vector<16x256xf32> to vector<16x128xf32>
    %c0_7 = arith.constant 0 : index
    %c0_8 = arith.constant 0 : index
    %15 = vector.load %arg5[%c0_7, %c0_8] : memref<1x128xf32, #tpu.memory_space<vmem>>, vector<1x128xf32>
    %16 = vector.broadcast %15 : vector<1x128xf32> to vector<16x128xf32>
    %17 = arith.addf %14, %16 : vector<16x128xf32>
    %18 = vector.broadcast %9 : vector<16x1xf32> to vector<16x128xf32>
    %19 = arith.mulf %18, %17 : vector<16x128xf32>
    %20 = vector.extract_strided_slice %5 {offsets = [0, 128], sizes = [16, 128], strides = [1, 1]} : vector<16x256xf32> to vector<16x128xf32>
    %c0_9 = arith.constant 0 : index
    %c0_10 = arith.constant 0 : index
    %21 = vector.load %arg6[%c0_9, %c0_10] : memref<1x128xf32, #tpu.memory_space<vmem>>, vector<1x128xf32>
    %22 = vector.broadcast %21 : vector<1x128xf32> to vector<16x128xf32>
    %23 = arith.addf %20, %22 : vector<16x128xf32>
    %24 = vector.broadcast %13 : vector<16x1xf32> to vector<16x128xf32>
    %25 = arith.mulf %24, %23 : vector<16x128xf32>
    %26 = arith.addf %19, %25 : vector<16x128xf32>
    %27 = vector.extract_strided_slice %26 {offsets = [0, 0], sizes = [16, 64], strides = [1, 1]} : vector<16x128xf32> to vector<16x64xf32>
    %28 = arith.negf %27 : vector<16x64xf32>
    %29 = math.exp %28 : vector<16x64xf32>
    %cst_11 = arith.constant 1.000000e+00 : f32
    %30 = vector.broadcast %cst_11 : f32 to vector<16x64xf32>
    %31 = arith.addf %30, %29 : vector<16x64xf32>
    %32 = arith.divf %30, %31 : vector<16x64xf32>
    %33 = vector.extract_strided_slice %32 {offsets = [0, 0], sizes = [16, 32], strides = [1, 1]} : vector<16x64xf32> to vector<16x32xf32>
    %34 = vector.extract_strided_slice %32 {offsets = [0, 32], sizes = [16, 32], strides = [1, 1]} : vector<16x64xf32> to vector<16x32xf32>
    %35 = vector.extract_strided_slice %26 {offsets = [0, 64], sizes = [16, 32], strides = [1, 1]} : vector<16x128xf32> to vector<16x32xf32>
    %36 = vector.extract_strided_slice %26 {offsets = [0, 96], sizes = [16, 32], strides = [1, 1]} : vector<16x128xf32> to vector<16x32xf32>
    %37 = arith.mulf %33, %36 : vector<16x32xf32>
    %38 = arith.addf %35, %37 : vector<16x32xf32>
    %39 = math.tanh %38 : vector<16x32xf32>
    %cst_12 = arith.constant 1.000000e+00 : f32
    %40 = vector.broadcast %cst_12 : f32 to vector<16x32xf32>
    %41 = arith.subf %40, %34 : vector<16x32xf32>
    %42 = arith.mulf %41, %39 : vector<16x32xf32>
    %43 = arith.mulf %34, %1 : vector<16x32xf32>
    %44 = arith.addf %42, %43 : vector<16x32xf32>
    %45 = arith.addf %9, %13 : vector<16x1xf32>
    %46 = vector.broadcast %45 : vector<16x1xf32> to vector<16x32xf32>
    %47 = arith.mulf %44, %46 : vector<16x32xf32>
    %c0_13 = arith.constant 0 : index
    %c0_14 = arith.constant 0 : index
    %48 = vector.load %arg7[%c0_13, %c0_14] : memref<16x32xf32, #tpu.memory_space<vmem>>, vector<16x32xf32>
    tpu.vector_store %arg7[%c0_13, %c0_14], %47 {strides = array<i32>} : memref<16x32xf32, #tpu.memory_space<vmem>>, vector<16x32xf32>,
    return
  }
  func.func @transform_0(%arg0: i32) -> (i32, i32) {
    %c0_i32 = arith.constant 0 : i32
    %c0_i32_0 = arith.constant 0 : i32
    return %arg0, %c0_i32 : i32, i32
  }
  func.func @transform_1(%arg0: i32) -> (i32, i32) {
    %c0_i32 = arith.constant 0 : i32
    %c0_i32_0 = arith.constant 0 : i32
    return %arg0, %c0_i32 : i32, i32
  }
  func.func @transform_2(%arg0: i32) -> (i32, i32) {
    %c0_i32 = arith.constant 0 : i32
    %c0_i32_0 = arith.constant 0 : i32
    return %arg0, %c0_i32 : i32, i32
  }
  func.func @transform_3(%arg0: i32) -> (i32, i32) {
    %c0_i32 = arith.constant 0 : i32
    %c0_i32_0 = arith.constant 0 : i32
    %c0_i32_1 = arith.constant 0 : i32
    return %c0_i32, %c0_i32_0 : i32, i32
  }
  func.func @transform_4(%arg0: i32) -> (i32, i32) {
    %c0_i32 = arith.constant 0 : i32
    %c0_i32_0 = arith.constant 0 : i32
    %c0_i32_1 = arith.constant 0 : i32
    return %c0_i32, %c0_i32_0 : i32, i32
  }
  func.func @transform_5(%arg0: i32) -> (i32, i32) {
    %c0_i32 = arith.constant 0 : i32
    %c0_i32_0 = arith.constant 0 : i32
    %c0_i32_1 = arith.constant 0 : i32
    return %c0_i32, %c0_i32_0 : i32, i32
  }
  func.func @transform_6(%arg0: i32) -> (i32, i32) {
    %c0_i32 = arith.constant 0 : i32
    %c0_i32_0 = arith.constant 0 : i32
    return %arg0, %c0_i32 : i32, i32
  }
}

</mosaic_0001>

<llo_original>
// kernel: tpu_custom_call.1
$region0: #{tpu_custom_call.1}
  #allocation0 [shape = 'u32[]', space=smem, size = 0x4, offset = 0x4, fixed_abs, tag = 'smem constant byte address 0x4 - core index']
  #allocation1 [shape = 'u32[72,128]{1,0:T(1,128)}', space=vmem, size = 0x9000, scoped, tag = 'internal scratch']
  %s0 = inlined_call_operand.vmem [shape: f32[16,32], index: 0, kind: input, shape index: {}]
  %s1 = inlined_call_operand.hbm [shape: f32[16,32], index: 1, kind: input, shape index: {}]
  %s2 = inlined_call_operand.vmem [shape: s32[16,1], index: 2, kind: input, shape index: {}]
  %s3 = inlined_call_operand.hbm [shape: f32[64,256], index: 3, kind: input, shape index: {}]
  %s4 = inlined_call_operand.vmem [shape: f32[1,128], index: 4, kind: input, shape index: {}]
  %s5 = inlined_call_operand.vmem [shape: f32[1,128], index: 5, kind: input, shape index: {}]
  %s6 = inlined_call_operand.hbm [shape: f32[16,32], index: 6, kind: output, shape index: {}]
  %s7 = sld [smem:[#allocation0]]
  $region42: #{tpu_custom_call.1} parent=0
    _
  %s9 = ssub.s32 1, %s7
  %s10 = scalar_select 0, %s9, %s7
  $region1: #{tpu_custom_call.1} parent=0
    #allocation2 [shape = 'u8[8192]{0}', space=vmem, size = 0x2000, scoped, tag = 'input window, operand 1, single buffered']
    #allocation3 [shape = 's32[1]{0}', space=sflag, size = 0x4, scoped, tag = 'scoped memory for tpu_custom_call.1']
    #allocation4 [shape = 's32[1]{0}', space=sflag, size = 0x4, scoped, tag = 'scoped memory for tpu_custom_call.1']
    #allocation5 [shape = 'u8[65536]{0}', space=vmem, size = 0x10000, scoped, tag = 'input window, operand 3, single buffered']
    #allocation6 [shape = 's32[1]{0}', space=sflag, size = 0x4, scoped, tag = 'scoped memory for tpu_custom_call.1']
    #allocation7 [shape = 'u8[8192]{0}', space=vmem, size = 0x2000, scoped, tag = 'output window, operand 0, single buffered']
    %11 = vsyncpa [#allocation3], 0
    %12 = vsyncpa [#allocation6], 0
    %13 = vsyncpa [#allocation4], 0
    // Predicated region
    $region2: #{tpu_custom_call.1} parent=1 // pred_check
      _
    $region3: #{tpu_custom_call.1} parent=1 // pred_check_branch
      %15 = sbr.rel (0) target = $region5
    $region4: #{tpu_custom_call.1} parent=1 // pred_region
      _
    $region5: #{tpu_custom_call.1} parent=1 // pred_fallthru
      _
    // Predicated region
    $region6: #{tpu_custom_call.1} parent=1 // pred_check
      _
    $region7: #{tpu_custom_call.1} parent=1 // pred_check_branch
      %17 = sbr.rel (0) target = $region9
    $region8: #{tpu_custom_call.1} parent=1 // pred_region
      %19 = vsyncadd [#allocation3], 0
      %s20 = sshll.u32 %s1, 4
      %s21 = int_to_ptr.hbm [resolvable:$true] %s20
      %s22 = sshll.u32 [#allocation2], 4
      %s23 = int_to_ptr.vmem [resolvable:$true] %s22
      %28 = dma.hbm_to_vmem [thread:$0]  %s21, 256, %s23, [#allocation3], 128, 128, 8
    $region9: #{tpu_custom_call.1} parent=1 // pred_fallthru
      _
    // Predicated region
    $region10: #{tpu_custom_call.1} parent=1 // pred_check
      _
    $region11: #{tpu_custom_call.1} parent=1 // pred_check_branch
      %30 = sbr.rel (0) target = $region13
    $region12: #{tpu_custom_call.1} parent=1 // pred_region
      _
    $region13: #{tpu_custom_call.1} parent=1 // pred_fallthru
      _
    // Predicated region
    $region14: #{tpu_custom_call.1} parent=1 // pred_check
      _
    $region15: #{tpu_custom_call.1} parent=1 // pred_check_branch
      %32 = sbr.rel (0) target = $region17
    $region16: #{tpu_custom_call.1} parent=1 // pred_region
      %34 = vsyncadd [#allocation6], 0
      %s35 = sshll.u32 %s3, 4
      %s36 = int_to_ptr.hbm [resolvable:$true] %s35
      %s37 = sshll.u32 [#allocation5], 4
      %s38 = int_to_ptr.vmem [resolvable:$true] %s37
      %43 = dma.hbm_to_vmem [thread:$0]  %s36, 2048, %s38, [#allocation6], 256, 256, 16
    $region17: #{tpu_custom_call.1} parent=1 // pred_fallthru
      _
    // Predicated region
    $region18: #{tpu_custom_call.1} parent=1 // pred_check
      _
    $region19: #{tpu_custom_call.1} parent=1 // pred_check_branch
      %45 = sbr.rel (0) target = $region21
    $region20: #{tpu_custom_call.1} parent=1 // pred_region
      _
    $region21: #{tpu_custom_call.1} parent=1 // pred_fallthru
      _
    // Predicated region
    $region22: #{tpu_custom_call.1} parent=1 // pred_check
      _
    $region23: #{tpu_custom_call.1} parent=1 // pred_check_branch
      %47 = sbr.rel (0) target = $region25
    $region24: #{tpu_custom_call.1} parent=1 // pred_region
      _
    $region25: #{tpu_custom_call.1} parent=1 // pred_fallthru
      _
    // Predicated region
    $region26: #{tpu_custom_call.1} parent=1 // pred_check
      _
    $region27: #{tpu_custom_call.1} parent=1 // pred_check_branch
      %49 = sbr.rel (0) target = $region29
    $region28: #{tpu_custom_call.1} parent=1 // pred_region
      %51 = dma.done [#allocation3], 256
    $region29: #{tpu_custom_call.1} parent=1 // pred_fallthru
      _
    // Predicated region
    $region30: #{tpu_custom_call.1} parent=1 // pred_check
      _
    $region31: #{tpu_custom_call.1} parent=1 // pred_check_branch
      %53 = sbr.rel (0) target = $region33
    $region32: #{tpu_custom_call.1} parent=1 // pred_region
      %55 = dma.done [#allocation6], 2048
    $region33: #{tpu_custom_call.1} parent=1 // pred_fallthru
      _
    %v56 = vld [vmem:[%s0] sm:$0xff]
    %v57 = vld [vmem:[%s0 + $0x8] sm:$0xff]
    %v58 = vld [vmem:[#allocation2] sm:$0xff]
    %v59 = vld [vmem:[#allocation2 + $0x8] sm:$0xff]
    %v60 = vld [vmem:[%s2] sm:$0xff]
    %v61 = vld [vmem:[%s2 + $0x8] sm:$0xff]
    %64 = vrot.lane.b32.xlu0 %v58, 32
    %v65 = vpop.permute.xlu0 %64
    %66 = vrot.lane.b32.xlu0 %v59, 32
    %v67 = vpop.permute.xlu0 %66
    %vm70 = vcmask 261120
    %v71 = vsel %vm70, %v56, %v65
    %v72 = vsel %vm70, %v57, %v67
    %v73 = vld [vmem:[#allocation5] sm:$0xff]
    %v74 = vld [vmem:[#allocation5 + $0x8] sm:$0xff]
    %v75 = vld [vmem:[#allocation5 + $0x10] sm:$0xff]
    %v76 = vld [vmem:[#allocation5 + $0x18] sm:$0xff]
    %v77 = vld [vmem:[#allocation5 + $0x20] sm:$0xff]
    %v78 = vld [vmem:[#allocation5 + $0x28] sm:$0xff]
    %v79 = vld [vmem:[#allocation5 + $0x30] sm:$0xff]
    %v80 = vld [vmem:[#allocation5 + $0x38] sm:$0xff]
    %v81 = vld [vmem:[#allocation5 + $0x40] sm:$0xff]
    %v82 = vld [vmem:[#allocation5 + $0x48] sm:$0xff]
    %v83 = vld [vmem:[#allocation5 + $0x50] sm:$0xff]
    %v84 = vld [vmem:[#allocation5 + $0x58] sm:$0xff]
    %v85 = vld [vmem:[#allocation5 + $0x60] sm:$0xff]
    %v86 = vld [vmem:[#allocation5 + $0x68] sm:$0xff]
    %v87 = vld [vmem:[#allocation5 + $0x70] sm:$0xff]
    %v88 = vld [vmem:[#allocation5 + $0x78] sm:$0xff]
    %vm89 = vcmask 523264
    %v91 = vsel %vm89, %v71, 0
    %v94 = vsel %vm89, %v72, 0
    %96 = vmatpush.msra.mxu0 0.0
    %97 = vmatpush.msra.mxu0 0.0
    %98 = vmatpush.msra.mxu0 0.0
    %99 = vmatpush.msra.mxu0 0.0
    %100 = vmatpush.msra.mxu0 0.0
    %101 = vmatpush.msra.mxu0 0.0
    %102 = vmatpush.msra.mxu0 0.0
    %103 = vmatpush.msra.mxu0 0.0
    %104 = vmatpush.msra.mxu0 %v87
    %105 = vmatpush.msra.mxu0 %v85
    %106 = vmatpush.msra.mxu0 %v83
    %107 = vmatpush.msra.mxu0 %v81
    %108 = vmatpush.msra.mxu0 %v79
    %109 = vmatpush.msra.mxu0 %v77
    %110 = vmatpush.msra.mxu0 %v75
    %111 = vmatpush.msra.mxu0 %v73
    %112 = vmatmul.f32.gmra.mxu0 %v91
    %v113 = vpop.f32.mrf.mxu0
    %v114 = vadd.f32 0.0, %v113
    %115 = vmatmul.f32.gmra.mxu0 %v94
    %v116 = vpop.f32.mrf.mxu0
    %v117 = vadd.f32 0.0, %v116
    %118 = vdwg.mxu0
    %119 = vmatpush.msra.mxu0 0.0
    %120 = vmatpush.msra.mxu0 0.0
    %121 = vmatpush.msra.mxu0 0.0
    %122 = vmatpush.msra.mxu0 0.0
    %123 = vmatpush.msra.mxu0 0.0
    %124 = vmatpush.msra.mxu0 0.0
    %125 = vmatpush.msra.mxu0 0.0
    %126 = vmatpush.msra.mxu0 0.0
    %127 = vmatpush.msra.mxu0 %v88
    %128 = vmatpush.msra.mxu0 %v86
    %129 = vmatpush.msra.mxu0 %v84
    %130 = vmatpush.msra.mxu0 %v82
    %131 = vmatpush.msra.mxu0 %v80
    %132 = vmatpush.msra.mxu0 %v78
    %133 = vmatpush.msra.mxu0 %v76
    %134 = vmatpush.msra.mxu0 %v74
    %135 = vmatmul.f32.gmra.mxu0 %v91
    %v136 = vpop.f32.mrf.mxu0
    %v137 = vadd.f32 0.0, %v136
    %138 = vmatmul.f32.gmra.mxu0 %v94
    %v139 = vpop.f32.mrf.mxu0
    %v140 = vadd.f32 0.0, %v139
    %141 = vdwg.mxu0
    %vm142 = vcmp.eq.s32.totalorder %v60, 0
    %vm143 = vcmp.eq.s32.totalorder %v61, 0
    %v144 = vsel %vm142, 1, 0
    %v145 = vsel %vm143, 1, 0
    %v146 = vcvt.s32.f32 %v144
    %v147 = vcvt.s32.f32 %v145
    %vm148 = vcmp.eq.s32.totalorder %v60, 1
    %vm149 = vcmp.eq.s32.totalorder %v61, 1
    %v150 = vsel %vm148, 1, 0
    %v151 = vsel %vm149, 1, 0
    %v152 = vcvt.s32.f32 %v150
    %v153 = vcvt.s32.f32 %v151
    %v154 = vld [vmem:[%s4] sm:$0x1]
    %v156 = vperm.slane %v154, 0
    %v158 = vadd.f32 %v114, %v156
    %v159 = vadd.f32 %v117, %v156
    %161 = vset.pattern.permute.xlu0 0
    %162 = vperm.xlu0 %161, %v146
    %v163 = vpop.permute.xlu0 %162
    %166 = vset.pattern.permute.xlu0 0
    %167 = vperm.xlu0 %166, %v147
    %v168 = vpop.permute.xlu0 %167
    %v170 = vmul.f32 %v163, %v158
    %v171 = vmul.f32 %v168, %v159
    %v172 = vld [vmem:[%s5] sm:$0x1]
    %v174 = vperm.slane %v172, 0
    %v176 = vadd.f32 %v137, %v174
    %v177 = vadd.f32 %v140, %v174
    %179 = vset.pattern.permute.xlu0 0
    %180 = vperm.xlu0 %179, %v152
    %v181 = vpop.permute.xlu0 %180
    %184 = vset.pattern.permute.xlu0 0
    %185 = vperm.xlu0 %184, %v153
    %v186 = vpop.permute.xlu0 %185
    %v188 = vmul.f32 %v181, %v176
    %v189 = vmul.f32 %v186, %v177
    %v190 = vadd.f32 %v170, %v188
    %v191 = vadd.f32 %v171, %v189
    %v192 = vxor.u32 %v190, 2147483648
    %v193 = vxor.u32 %v191, 2147483648
    %v194 = vmul.f32 %v192, 1.442695
    %v195 = vpow.pop %v194
    %v196 = vmul.f32 %v193, 1.442695
    %v197 = vpow.pop %v196
    %v198 = vadd.f32 %v195, 1.0
    %v199 = vadd.f32 %v197, 1.0
    %v200 = vrcp.pop %v198
    %v201 = vmul.f32 %v198, %v200
    %v202 = vsub.f32 1.0, %v201
    %v203 = vmul.f32 %v200, %v202
    %v204 = vadd.f32 %v200, %v203
    %vm205 = vweird.f32 %v198
    %vm206 = vweird.f32 %v200
    %vm207 = vmor %vm205, %vm206
    %v208 = vsel %vm207, %v200, %v204
    %v209 = vand.u32 2147483647, %v198
    %vm210 = vcmp.eq.f32.partialorder %v209, 8.507059e+37
    %v211 = vand.u32 %v198, 2147483648
    %v212 = vor.u32 1.1754944e-38, %v211
    %v213 = vsel %vm210, %v212, %v208
    %v214 = vmul.f32 1.0, %v213
    %v215 = vrcp.pop %v199
    %v216 = vmul.f32 %v199, %v215
    %v217 = vsub.f32 1.0, %v216
    %v218 = vmul.f32 %v215, %v217
    %v219 = vadd.f32 %v215, %v218
    %vm220 = vweird.f32 %v199
    %vm221 = vweird.f32 %v215
    %vm222 = vmor %vm220, %vm221
    %v223 = vsel %vm222, %v215, %v219
    %v224 = vand.u32 2147483647, %v199
    %vm225 = vcmp.eq.f32.partialorder %v224, 8.507059e+37
    %v226 = vand.u32 %v199, 2147483648
    %v227 = vor.u32 1.1754944e-38, %v226
    %v228 = vsel %vm225, %v227, %v223
    %v229 = vmul.f32 1.0, %v228
    %232 = vrot.lane.b32.xlu0 %v190, 32
    %v233 = vpop.permute.xlu0 %232
    %234 = vrot.lane.b32.xlu0 %v191, 32
    %v235 = vpop.permute.xlu0 %234
    %v238 = vmul.f32 %v214, %v233
    %v239 = vmul.f32 %v229, %v235
    %242 = vrot.lane.b32.xlu0 %v238, 64
    %v243 = vpop.permute.xlu0 %242
    %244 = vrot.lane.b32.xlu0 %v239, 64
    %v245 = vpop.permute.xlu0 %244
    %v248 = vadd.f32 %v190, %v243
    %v249 = vadd.f32 %v191, %v245
    %v250 = vtanh.pop %v248
    %v251 = vtanh.pop %v249
    %v252 = vsub.f32 1.0, %v214
    %v253 = vsub.f32 1.0, %v229
    %256 = vrot.lane.b32.xlu0 %v250, 96
    %v257 = vpop.permute.xlu0 %256
    %258 = vrot.lane.b32.xlu0 %v251, 96
    %v259 = vpop.permute.xlu0 %258
    %v262 = vmul.f32 %v252, %v257
    %v263 = vmul.f32 %v253, %v259
    %v264 = vmul.f32 %v214, %v65
    %v265 = vmul.f32 %v229, %v67
    %v266 = vadd.f32 %v262, %v264
    %v267 = vadd.f32 %v263, %v265
    %v268 = vadd.f32 %v146, %v152
    %v269 = vadd.f32 %v147, %v153
    %271 = vset.pattern.permute.xlu0 0
    %272 = vperm.xlu0 %271, %v268
    %v273 = vpop.permute.xlu0 %272
    %276 = vset.pattern.permute.xlu0 0
    %277 = vperm.xlu0 %276, %v269
    %v278 = vpop.permute.xlu0 %277
    %v280 = vmul.f32 %v266, %v273
    %v281 = vmul.f32 %v267, %v278
    %284 = vrot.lane.b32.xlu0 %v280, 96
    %v285 = vpop.permute.xlu0 %284
    %286 = vrot.lane.b32.xlu0 %v281, 96
    %v287 = vpop.permute.xlu0 %286
    %290 = vst.msk [vmem:[#allocation7] sm:$0xff] %vm70, %v285
    %291 = vst.msk [vmem:[#allocation7 + $0x8] sm:$0xff] %vm70, %v287
    // Predicated region
    $region34: #{tpu_custom_call.1} parent=1 // pred_check
      _
    $region35: #{tpu_custom_call.1} parent=1 // pred_check_branch
      %293 = sbr.rel (0) target = $region37
    $region36: #{tpu_custom_call.1} parent=1 // pred_region
      %295 = vsyncadd [#allocation4], 0
      %s296 = sshll.u32 [#allocation7], 4
      %s297 = int_to_ptr.vmem [resolvable:$true] %s296
      %s298 = sshll.u32 %s6, 4
      %s299 = int_to_ptr.hbm [resolvable:$true] %s298
      %304 = dma.vmem_to_hbm [thread:$0]  %s297, 256, %s299, [#allocation4], 128, 128, 8
    $region37: #{tpu_custom_call.1} parent=1 // pred_fallthru
      _
    // Predicated region
    $region38: #{tpu_custom_call.1} parent=1 // pred_check
      _
    $region39: #{tpu_custom_call.1} parent=1 // pred_check_branch
      %306 = sbr.rel (0) target = $region41
    $region40: #{tpu_custom_call.1} parent=1 // pred_region
      %308 = dma.done [#allocation4], 256
    $region41: #{tpu_custom_call.1} parent=1 // pred_fallthru
      _
    %309 = vsyncpa [#allocation3], 1
    %310 = vsyncpa [#allocation6], 1
    %311 = vsyncpa [#allocation4], 1

</llo_original>
